<compile_context>
chip_gen: v5e
topology: v5e:2x2
jax: 0.10.0
libtpu: 0.0.40
codegen_flags: <defaults>
</compile_context>

<pallas_src>
import functools

import jax
import jax.numpy as jnp
from jax.experimental import pallas as pl
from jax.experimental.pallas import tpu as pltpu

LATENT_DIM = 64
NOISE_DIM = 64
N_FEATURES = (256, 512)
NEG_SLOPE = 0.01  # nn.LeakyReLU default negative_slope


def _round_up(x, m):
    return ((x + m - 1) // m) * m


def _leaky_relu(h):
    # Epilogue stays in f32 (v5e VPU/EUP have no bf16 path); the cast to the
    # MXU operand dtype happens only on the next matmul input.
    return jnp.where(h > 0, h, NEG_SLOPE * h)


def generator_kernel(x_ref, n_ref, w1_ref, b1_ref, w2_ref, b2_ref,
                     w3_ref, b3_ref, o_ref, *, d_lat):
    cdt = w1_ref.dtype  # MXU operand dtype (bf16 default; f32 = exact path)

    xa = x_ref[...].astype(cdt)   # (tb, d_lat)   cast in VMEM, no extra HBM pass
    xb = n_ref[...].astype(cdt)   # (tb, d_noise)

    # torch.cat([x, noise], 1) @ W1  ==  x @ W1[:d_lat] + noise @ W1[d_lat:]
    h = (jnp.dot(xa, w1_ref[:d_lat, :], preferred_element_type=jnp.float32)
         + jnp.dot(xb, w1_ref[d_lat:, :], preferred_element_type=jnp.float32)
         + b1_ref[...])
    h = _leaky_relu(h).astype(cdt)

    # Linear(256 -> 512) + LeakyReLU
    h = jnp.dot(h, w2_ref[...], preferred_element_type=jnp.float32) + b2_ref[...]
    h = _leaky_relu(h).astype(cdt)

    # Linear(512 -> 64)
    out = jnp.dot(h, w3_ref[...], preferred_element_type=jnp.float32) + b3_ref[...]
    o_ref[...] = out.astype(o_ref.dtype)


def generator_forward(x, noise, params, *, tb=None, compute_dtype=jnp.bfloat16):
    """x: (B, LATENT_DIM), noise: (B, NOISE_DIM) -> (B, LATENT_DIM) float32."""
    B = x.shape[0]
    w1, b1, w2, b2, w3, b3 = params
    d_lat, d_noise = x.shape[1], noise.shape[1]
    d_in, d_h1 = w1.shape          # 128, 256
    d_h2 = w2.shape[1]             # 512
    d_out = w3.shape[1]            # 64
    assert d_lat + d_noise == d_in

    in_itemsize = jnp.dtype(x.dtype).itemsize

    # Pad the batch only to a multiple of 8 (sublane granularity); the grid
    # uses cdiv so the last (possibly ragged) tile is masked by Pallas.
    B_pad = _round_up(B, 8)
    if B_pad != B:
        pad = ((0, B_pad - B), (0, 0))
        x = jnp.pad(x, pad)
        noise = jnp.pad(noise, pad)

    if tb is None:
        # >= 2 grid programs whenever the batch allows it (feeds both
        # TensorCores on v7x), capped at 2048 rows to amortize per-step
        # pipeline overhead without blowing VMEM.
        tb = min(2048, _round_up(pl.cdiv(B_pad, 2), 8))
    tb = max(8, min(_round_up(tb, 8), B_pad))
    grid = pl.cdiv(B_pad, tb)

    # bf16 (or f32) weights for the MXU; biases stay f32 (added to f32 acc).
    w1c, w2c, w3c = (w.astype(compute_dtype) for w in (w1, w2, w3))
    b1c, b2c, b3c = (b.astype(jnp.float32).reshape(1, -1) for b in (b1, b2, b3))

    def batch_spec(d):
        return pl.BlockSpec((tb, d), lambda i: (i, 0))

    def full(shape):
        return pl.BlockSpec(shape, lambda i: (0, 0))

    w_itemsize = jnp.dtype(compute_dtype).itemsize
    flops = 2 * B_pad * (d_in * d_h1 + d_h1 * d_h2 + d_h2 * d_out)
    bytes_accessed = (
        B_pad * (d_lat + d_noise) * in_itemsize       # activations in
        + B_pad * d_out * 4                           # output (f32)
        + (d_in * d_h1 + d_h1 * d_h2 + d_h2 * d_out) * w_itemsize
        + (d_h1 + d_h2 + d_out) * 4)                  # biases

    out = pl.pallas_call(
        functools.partial(generator_kernel, d_lat=d_lat),
        out_shape=jax.ShapeDtypeStruct((B_pad, d_out), jnp.float32),
        grid_spec=pltpu.PrefetchScalarGridSpec(
            num_scalar_prefetch=0,
            grid=(grid,),
            in_specs=[
                batch_spec(d_lat),     # x
                batch_spec(d_noise),   # noise
                full((d_in, d_h1)),    # w1
                full((1, d_h1)),       # b1
                full((d_h1, d_h2)),    # w2
                full((1, d_h2)),       # b2
                full((d_h2, d_out)),   # w3
                full((1, d_out)),      # b3
            ],
            out_specs=batch_spec(d_out),
        ),
        compiler_params=pltpu.CompilerParams(
            # batch grid axis is independent -> shard across TCs on v7x
            dimension_semantics=("parallel",),
            vmem_limit_bytes=32 * 1024 * 1024),
        cost_estimate=pl.CostEstimate(
            flops=flops, transcendentals=0, bytes_accessed=bytes_accessed),
    )(x, noise, w1c, b1c, w2c, b2c, w3c, b3c)

    if B_pad != B:
        out = out[:B]
    return out  # f32 (f32 params -> f32 output, matching PyTorch)


def init_params(key):
    """Deterministic synthetic init matching the module's layer shapes."""
    dims = [LATENT_DIM + NOISE_DIM] + list(N_FEATURES) + [LATENT_DIM]
    params = []
    keys = jax.random.split(key, len(dims) - 1)
    for k, d_in, d_out in zip(keys, dims[:-1], dims[1:]):
        kw, kb = jax.random.split(k)
        # weight stored as (in, out) == transposed PyTorch (out, in)
        w = (jax.random.normal(kw, (d_in, d_out), jnp.float32)
             * (1.0 / jnp.sqrt(d_in)))
        b = jax.random.normal(kb, (1, d_out), jnp.float32) * 0.01
        params += [w, b]
    return tuple(params)


def reference_forward(x, noise, params, compute_dtype=jnp.float32):
    """Pure-JAX reference; compute_dtype mirrors the kernel's operand dtype."""
    w1, b1, w2, b2, w3, b3 = params
    cdt = compute_dtype
    h = jnp.concatenate([x, noise], axis=1).astype(cdt)
    h = _leaky_relu(jnp.dot(h, w1.astype(cdt),
                            preferred_element_type=jnp.float32) + b1)
    h = _leaky_relu(jnp.dot(h.astype(cdt), w2.astype(cdt),
                            preferred_element_type=jnp.float32) + b2)
    return jnp.dot(h.astype(cdt), w3.astype(cdt),
                   preferred_element_type=jnp.float32) + b3


if __name__ == "__main__":
    key = jax.random.PRNGKey(0)
    kx, kn, kp = jax.random.split(key, 3)
    params = init_params(kp)

    # --- small primary case (bf16 compute, f32 accumulate) ---
    B = 8
    x = jax.random.normal(kx, (B, LATENT_DIM), jnp.float32)
    noise = jax.random.normal(kn, (B, NOISE_DIM), jnp.float32)
    out = jax.block_until_ready(generator_forward(x, noise, params))
    assert out.shape == (B, LATENT_DIM) and out.dtype == jnp.float32
    ref_bf16 = reference_forward(x, noise, params, compute_dtype=jnp.bfloat16)
    ref_f32 = reference_forward(x, noise, params, compute_dtype=jnp.float32)
    assert jnp.allclose(out, ref_bf16, atol=2e-2, rtol=2e-2)
    assert jnp.allclose(out, ref_f32, atol=1.5e-1, rtol=1.5e-1)

    # --- exact f32 path (PyTorch-matching numerics; validation only) ---
    out_f32 = jax.block_until_ready(
        generator_forward(x, noise, params, compute_dtype=jnp.float32))
    assert jnp.allclose(out_f32, ref_f32, atol=1e-4, rtol=1e-4)

    # --- batch not a multiple of 8 -> exercises the pad-to-8 path ---
    B2 = 2
    kx2, kn2 = jax.random.split(jax.random.PRNGKey(1))
    x2 = jax.random.normal(kx2, (B2, LATENT_DIM), jnp.float32)
    n2 = jax.random.normal(kn2, (B2, NOISE_DIM), jnp.float32)
    out2 = jax.block_until_ready(generator_forward(x2, n2, params))
    assert out2.shape == (B2, LATENT_DIM)
    ref2 = reference_forward(x2, n2, params, compute_dtype=jnp.bfloat16)
    assert jnp.allclose(out2, ref2, atol=2e-2, rtol=2e-2)

    # --- batch where the tile does not divide B_pad -> ragged last block ---
    B3 = 20  # B_pad=24, tb=16, grid=2 (last block masked by Pallas)
    kx3, kn3 = jax.random.split(jax.random.PRNGKey(2))
    x3 = jax.random.normal(kx3, (B3, LATENT_DIM), jnp.float32)
    n3 = jax.random.normal(kn3, (B3, NOISE_DIM), jnp.float32)
    out3 = jax.block_until_ready(generator_forward(x3, n3, params))
    assert out3.shape == (B3, LATENT_DIM)
    ref3 = reference_forward(x3, n3, params, compute_dtype=jnp.bfloat16)
    assert jnp.allclose(out3, ref3, atol=2e-2, rtol=2e-2)
    assert jnp.all(jnp.isfinite(out3))

    print("KERNEL_OK")
</pallas_src>

<mosaic_0001>
module attributes {stable_mosaic.version = 11 : i64} {
  func.func @generator_kernel(%arg0: i32, %arg1: memref<8x64xf32, #tpu.memory_space<vmem>>, %arg2: memref<8x64xf32, #tpu.memory_space<vmem>>, %arg3: memref<128x256xbf16, #tpu.memory_space<vmem>>, %arg4: memref<1x256xf32, #tpu.memory_space<vmem>>, %arg5: memref<256x512xbf16, #tpu.memory_space<vmem>>, %arg6: memref<1x512xf32, #tpu.memory_space<vmem>>, %arg7: memref<512x64xbf16, #tpu.memory_space<vmem>>, %arg8: memref<1x64xf32, #tpu.memory_space<vmem>>, %arg9: memref<8x64xf32, #tpu.memory_space<vmem>>) attributes {dimension_semantics = [#tpu.dimension_semantics<parallel>], iteration_bounds = array<i64: 1>, scalar_prefetch = 0 : i64, scratch_operands = 0 : i64, tpu.core_type = #tpu.core_type<tc>, window_params = [{transform_indices = @transform_0, window_bounds = array<i64: 8, 64>}, {transform_indices = @transform_1, window_bounds = array<i64: 8, 64>}, {pipeline_mode = #tpu.pipeline_mode<synchronous>, transform_indices = @transform_2, window_bounds = array<i64: 128, 256>}, {pipeline_mode = #tpu.pipeline_mode<synchronous>, transform_indices = @transform_3, window_bounds = array<i64: 1, 256>}, {pipeline_mode = #tpu.pipeline_mode<synchronous>, transform_indices = @transform_4, window_bounds = array<i64: 256, 512>}, {pipeline_mode = #tpu.pipeline_mode<synchronous>, transform_indices = @transform_5, window_bounds = array<i64: 1, 512>}, {pipeline_mode = #tpu.pipeline_mode<synchronous>, transform_indices = @transform_6, window_bounds = array<i64: 512, 64>}, {pipeline_mode = #tpu.pipeline_mode<synchronous>, transform_indices = @transform_7, window_bounds = array<i64: 1, 64>}, {transform_indices = @transform_8, window_bounds = array<i64: 8, 64>}]} {
    %c0 = arith.constant 0 : index
    %c0_0 = arith.constant 0 : index
    %0 = vector.load %arg1[%c0, %c0_0] : memref<8x64xf32, #tpu.memory_space<vmem>>, vector<8x64xf32>
    %1 = arith.truncf %0 : vector<8x64xf32> to vector<8x64xbf16>
    %c0_1 = arith.constant 0 : index
    %c0_2 = arith.constant 0 : index
    %2 = vector.load %arg2[%c0_1, %c0_2] : memref<8x64xf32, #tpu.memory_space<vmem>>, vector<8x64xf32>
    %3 = arith.truncf %2 : vector<8x64xf32> to vector<8x64xbf16>
    %c0_3 = arith.constant 0 : index
    %c0_4 = arith.constant 0 : index
    %4 = vector.load %arg3[%c0_3, %c0_4] : memref<128x256xbf16, #tpu.memory_space<vmem>>, vector<64x256xbf16>
    %cst = arith.constant dense<0.000000e+00> : vector<8x256xf32>
    %5 = tpu.matmul %1, %4, %cst {dimension_numbers = #tpu.dot_dimension_numbers<[1], [0], [0], [1], [0, 0, 1, 1], [], []>} : vector<8x64xbf16>, vector<64x256xbf16>, vector<8x256xf32> -> vector<8x256xf32>
    %c64 = arith.constant 64 : index
    %c0_5 = arith.constant 0 : index
    %6 = vector.load %arg3[%c64, %c0_5] : memref<128x256xbf16, #tpu.memory_space<vmem>>, vector<64x256xbf16>
    %cst_6 = arith.constant dense<0.000000e+00> : vector<8x256xf32>
    %7 = tpu.matmul %3, %6, %cst_6 {dimension_numbers = #tpu.dot_dimension_numbers<[1], [0], [0], [1], [0, 0, 1, 1], [], []>} : vector<8x64xbf16>, vector<64x256xbf16>, vector<8x256xf32> -> vector<8x256xf32>
    %8 = arith.addf %5, %7 : vector<8x256xf32>
    %c0_7 = arith.constant 0 : index
    %c0_8 = arith.constant 0 : index
    %9 = vector.load %arg4[%c0_7, %c0_8] : memref<1x256xf32, #tpu.memory_space<vmem>>, vector<1x256xf32>
    %10 = vector.broadcast %9 : vector<1x256xf32> to vector<8x256xf32>
    %11 = arith.addf %8, %10 : vector<8x256xf32>
    %cst_9 = arith.constant 0.000000e+00 : f32
    %12 = vector.broadcast %cst_9 : f32 to vector<8x256xf32>
    %13 = arith.cmpf ogt, %11, %12 : vector<8x256xf32>
    %cst_10 = arith.constant 0.00999999977 : f32
    %14 = vector.broadcast %cst_10 : f32 to vector<8x256xf32>
    %15 = arith.mulf %14, %11 : vector<8x256xf32>
    %16 = arith.select %13, %11, %15 : vector<8x256xi1>, vector<8x256xf32>
    %17 = arith.truncf %16 : vector<8x256xf32> to vector<8x256xbf16>
    %c0_11 = arith.constant 0 : index
    %c0_12 = arith.constant 0 : index
    %18 = vector.load %arg5[%c0_11, %c0_12] : memref<256x512xbf16, #tpu.memory_space<vmem>>, vector<256x512xbf16>
    %cst_13 = arith.constant dense<0.000000e+00> : vector<8x512xf32>
    %19 = tpu.matmul %17, %18, %cst_13 {dimension_numbers = #tpu.dot_dimension_numbers<[1], [0], [0], [1], [0, 0, 1, 1], [], []>} : vector<8x256xbf16>, vector<256x512xbf16>, vector<8x512xf32> -> vector<8x512xf32>
    %c0_14 = arith.constant 0 : index
    %c0_15 = arith.constant 0 : index
    %20 = vector.load %arg6[%c0_14, %c0_15] : memref<1x512xf32, #tpu.memory_space<vmem>>, vector<1x512xf32>
    %21 = vector.broadcast %20 : vector<1x512xf32> to vector<8x512xf32>
    %22 = arith.addf %19, %21 : vector<8x512xf32>
    %cst_16 = arith.constant 0.000000e+00 : f32
    %23 = vector.broadcast %cst_16 : f32 to vector<8x512xf32>
    %24 = arith.cmpf ogt, %22, %23 : vector<8x512xf32>
    %cst_17 = arith.constant 0.00999999977 : f32
    %25 = vector.broadcast %cst_17 : f32 to vector<8x512xf32>
    %26 = arith.mulf %25, %22 : vector<8x512xf32>
    %27 = arith.select %24, %22, %26 : vector<8x512xi1>, vector<8x512xf32>
    %28 = arith.truncf %27 : vector<8x512xf32> to vector<8x512xbf16>
    %c0_18 = arith.constant 0 : index
    %c0_19 = arith.constant 0 : index
    %29 = vector.load %arg7[%c0_18, %c0_19] : memref<512x64xbf16, #tpu.memory_space<vmem>>, vector<512x64xbf16>
    %cst_20 = arith.constant dense<0.000000e+00> : vector<8x64xf32>
    %30 = tpu.matmul %28, %29, %cst_20 {dimension_numbers = #tpu.dot_dimension_numbers<[1], [0], [0], [1], [0, 0, 1, 1], [], []>} : vector<8x512xbf16>, vector<512x64xbf16>, vector<8x64xf32> -> vector<8x64xf32>
    %c0_21 = arith.constant 0 : index
    %c0_22 = arith.constant 0 : index
    %31 = vector.load %arg8[%c0_21, %c0_22] : memref<1x64xf32, #tpu.memory_space<vmem>>, vector<1x64xf32>
    %32 = vector.broadcast %31 : vector<1x64xf32> to vector<8x64xf32>
    %33 = arith.addf %30, %32 : vector<8x64xf32>
    %c0_23 = arith.constant 0 : index
    %c0_24 = arith.constant 0 : index
    %34 = vector.load %arg9[%c0_23, %c0_24] : memref<8x64xf32, #tpu.memory_space<vmem>>, vector<8x64xf32>
    tpu.vector_store %arg9[%c0_23, %c0_24], %33 {strides = array<i32>} : memref<8x64xf32, #tpu.memory_space<vmem>>, vector<8x64xf32>,
    return
  }
  func.func @transform_0(%arg0: i32) -> (i32, i32) {
    %c0_i32 = arith.constant 0 : i32
    %c0_i32_0 = arith.constant 0 : i32
    return %arg0, %c0_i32 : i32, i32
  }
  func.func @transform_1(%arg0: i32) -> (i32, i32) {
    %c0_i32 = arith.constant 0 : i32
    %c0_i32_0 = arith.constant 0 : i32
    return %arg0, %c0_i32 : i32, i32
  }
  func.func @transform_2(%arg0: i32) -> (i32, i32) {
    %c0_i32 = arith.constant 0 : i32
    %c0_i32_0 = arith.constant 0 : i32
    %c0_i32_1 = arith.constant 0 : i32
    return %c0_i32, %c0_i32_0 : i32, i32
  }
  func.func @transform_3(%arg0: i32) -> (i32, i32) {
    %c0_i32 = arith.constant 0 : i32
    %c0_i32_0 = arith.constant 0 : i32
    %c0_i32_1 = arith.constant 0 : i32
    return %c0_i32, %c0_i32_0 : i32, i32
  }
  func.func @transform_4(%arg0: i32) -> (i32, i32) {
    %c0_i32 = arith.constant 0 : i32
    %c0_i32_0 = arith.constant 0 : i32
    %c0_i32_1 = arith.constant 0 : i32
    return %c0_i32, %c0_i32_0 : i32, i32
  }
  func.func @transform_5(%arg0: i32) -> (i32, i32) {
    %c0_i32 = arith.constant 0 : i32
    %c0_i32_0 = arith.constant 0 : i32
    %c0_i32_1 = arith.constant 0 : i32
    return %c0_i32, %c0_i32_0 : i32, i32
  }
  func.func @transform_6(%arg0: i32) -> (i32, i32) {
    %c0_i32 = arith.constant 0 : i32
    %c0_i32_0 = arith.constant 0 : i32
    %c0_i32_1 = arith.constant 0 : i32
    return %c0_i32, %c0_i32_0 : i32, i32
  }
  func.func @transform_7(%arg0: i32) -> (i32, i32) {
    %c0_i32 = arith.constant 0 : i32
    %c0_i32_0 = arith.constant 0 : i32
    %c0_i32_1 = arith.constant 0 : i32
    return %c0_i32, %c0_i32_0 : i32, i32
  }
  func.func @transform_8(%arg0: i32) -> (i32, i32) {
    %c0_i32 = arith.constant 0 : i32
    %c0_i32_0 = arith.constant 0 : i32
    return %arg0, %c0_i32 : i32, i32
  }
}

</mosaic_0001>

<llo_original>
// kernel: tpu_custom_call.1
$region0: #{tpu_custom_call.1}
  #allocation0 [shape = 'u32[]', space=smem, size = 0x4, offset = 0x4, fixed_abs, tag = 'smem constant byte address 0x4 - core index']
  #allocation1 [shape = 'u32[72,128]{1,0:T(1,128)}', space=vmem, size = 0x9000, scoped, tag = 'internal scratch']
  %s0 = inlined_call_operand.vmem [shape: f32[8,64], index: 0, kind: input, shape index: {}]
  %s1 = inlined_call_operand.vmem [shape: f32[8,64], index: 1, kind: input, shape index: {}]
  %s2 = inlined_call_operand.vmem [shape: bf16[128,256], index: 2, kind: input, shape index: {}]
  %s3 = inlined_call_operand.vmem [shape: f32[1,256], index: 3, kind: input, shape index: {}]
  %s4 = inlined_call_operand.hbm [shape: bf16[256,512], index: 4, kind: input, shape index: {}]
  %s5 = inlined_call_operand.vmem [shape: f32[1,512], index: 5, kind: input, shape index: {}]
  %s6 = inlined_call_operand.vmem [shape: bf16[512,64], index: 6, kind: input, shape index: {}]
  %s7 = inlined_call_operand.vmem [shape: f32[1,64], index: 7, kind: input, shape index: {}]
  %s8 = inlined_call_operand.hbm [shape: f32[8,64], index: 8, kind: output, shape index: {}]
  %s9 = sld [smem:[#allocation0]]
  $region46: #{tpu_custom_call.1} parent=0
    _
  %s11 = ssub.s32 1, %s9
  %s12 = scalar_select 0, %s11, %s9
  $region1: #{tpu_custom_call.1} parent=0
    #allocation2 [shape = 'u8[262144]{0}', space=vmem, size = 0x40000, scoped, tag = 'input window, operand 4, single buffered']
    #allocation3 [shape = 's32[1]{0}', space=sflag, size = 0x4, scoped, tag = 'scoped memory for tpu_custom_call.1']
    #allocation4 [shape = 's32[1]{0}', space=sflag, size = 0x4, scoped, tag = 'scoped memory for tpu_custom_call.1']
    #allocation5 [shape = 'u8[4096]{0}', space=vmem, size = 0x1000, scoped, tag = 'output window, operand 0, single buffered']
    %13 = vsyncpa [#allocation3], 0
    %14 = vsyncpa [#allocation4], 0
    // Predicated region
    $region2: #{tpu_custom_call.1} parent=1 // pred_check
      _
    $region3: #{tpu_custom_call.1} parent=1 // pred_check_branch
      %16 = sbr.rel (0) target = $region5
    $region4: #{tpu_custom_call.1} parent=1 // pred_region
      _
    $region5: #{tpu_custom_call.1} parent=1 // pred_fallthru
      _
    // Predicated region
    $region6: #{tpu_custom_call.1} parent=1 // pred_check
      _
    $region7: #{tpu_custom_call.1} parent=1 // pred_check_branch
      %18 = sbr.rel (0) target = $region9
    $region8: #{tpu_custom_call.1} parent=1 // pred_region
      _
    $region9: #{tpu_custom_call.1} parent=1 // pred_fallthru
      _
    // Predicated region
    $region10: #{tpu_custom_call.1} parent=1 // pred_check
      _
    $region11: #{tpu_custom_call.1} parent=1 // pred_check_branch
      %20 = sbr.rel (0) target = $region13
    $region12: #{tpu_custom_call.1} parent=1 // pred_region
      _
    $region13: #{tpu_custom_call.1} parent=1 // pred_fallthru
      _
    // Predicated region
    $region14: #{tpu_custom_call.1} parent=1 // pred_check
      _
    $region15: #{tpu_custom_call.1} parent=1 // pred_check_branch
      %22 = sbr.rel (0) target = $region17
    $region16: #{tpu_custom_call.1} parent=1 // pred_region
      _
    $region17: #{tpu_custom_call.1} parent=1 // pred_fallthru
      _
    // Predicated region
    $region18: #{tpu_custom_call.1} parent=1 // pred_check
      _
    $region19: #{tpu_custom_call.1} parent=1 // pred_check_branch
      %24 = sbr.rel (0) target = $region21
    $region20: #{tpu_custom_call.1} parent=1 // pred_region
      %26 = vsyncadd [#allocation3], 0
      %s27 = sshll.u32 %s4, 4
      %s28 = int_to_ptr.hbm [resolvable:$true] %s27
      %s29 = sshll.u32 [#allocation2], 4
      %s30 = int_to_ptr.vmem [resolvable:$true] %s29
      %35 = dma.hbm_to_vmem [thread:$0]  %s28, 8192, %s30, [#allocation3], 256, 256, 16
    $region21: #{tpu_custom_call.1} parent=1 // pred_fallthru
      _
    // Predicated region
    $region22: #{tpu_custom_call.1} parent=1 // pred_check
      _
    $region23: #{tpu_custom_call.1} parent=1 // pred_check_branch
      %37 = sbr.rel (0) target = $region25
    $region24: #{tpu_custom_call.1} parent=1 // pred_region
      _
    $region25: #{tpu_custom_call.1} parent=1 // pred_fallthru
      _
    // Predicated region
    $region26: #{tpu_custom_call.1} parent=1 // pred_check
      _
    $region27: #{tpu_custom_call.1} parent=1 // pred_check_branch
      %39 = sbr.rel (0) target = $region29
    $region28: #{tpu_custom_call.1} parent=1 // pred_region
      _
    $region29: #{tpu_custom_call.1} parent=1 // pred_fallthru
      _
    // Predicated region
    $region30: #{tpu_custom_call.1} parent=1 // pred_check
      _
    $region31: #{tpu_custom_call.1} parent=1 // pred_check_branch
      %41 = sbr.rel (0) target = $region33
    $region32: #{tpu_custom_call.1} parent=1 // pred_region
      _
    $region33: #{tpu_custom_call.1} parent=1 // pred_fallthru
      _
    // Predicated region
    $region34: #{tpu_custom_call.1} parent=1 // pred_check
      _
    $region35: #{tpu_custom_call.1} parent=1 // pred_check_branch
      %43 = sbr.rel (0) target = $region37
    $region36: #{tpu_custom_call.1} parent=1 // pred_region
      %45 = dma.done [#allocation3], 8192
    $region37: #{tpu_custom_call.1} parent=1 // pred_fallthru
      _
    %v47 = vld [vmem:[%s0] sm:$0xff]
    %v48 = vpack.c.bf16 %v47, %v47
    %v49 = vld [vmem:[%s1] sm:$0xff]
    %v50 = vpack.c.bf16 %v49, %v49
    %v51 = vld [vmem:[%s2] sm:$0xff]
    %v52 = vld [vmem:[%s2 + $0x8] sm:$0xff]
    %v53 = vld [vmem:[%s2 + $0x10] sm:$0xff]
    %v54 = vld [vmem:[%s2 + $0x18] sm:$0xff]
    %v55 = vld [vmem:[%s2 + $0x20] sm:$0xff]
    %v56 = vld [vmem:[%s2 + $0x28] sm:$0xff]
    %v57 = vld [vmem:[%s2 + $0x30] sm:$0xff]
    %v58 = vld [vmem:[%s2 + $0x38] sm:$0xff]
    %v59 = vld [vmem:[%s2 + $0x40] sm:$0xff]
    %v60 = vld [vmem:[%s2 + $0x48] sm:$0xff]
    %v61 = vld [vmem:[%s2 + $0x50] sm:$0xff]
    %v62 = vld [vmem:[%s2 + $0x58] sm:$0xff]
    %v63 = vld [vmem:[%s2 + $0x60] sm:$0xff]
    %v64 = vld [vmem:[%s2 + $0x68] sm:$0xff]
    %v65 = vld [vmem:[%s2 + $0x70] sm:$0xff]
    %v66 = vld [vmem:[%s2 + $0x78] sm:$0xff]
    %v75 = vunpack.c.l.b16 %v59
    %v76 = vunpack.c.h.b16 %v59
    %v77 = vunpack.c.l.b16 %v60
    %v78 = vunpack.c.h.b16 %v60
    %v79 = vunpack.c.l.b16 %v61
    %v80 = vunpack.c.h.b16 %v61
    %v81 = vunpack.c.l.b16 %v62
    %v82 = vunpack.c.h.b16 %v62
    %v83 = vunpack.c.l.b16 %v63
    %v84 = vunpack.c.h.b16 %v63
    %v85 = vunpack.c.l.b16 %v64
    %v86 = vunpack.c.h.b16 %v64
    %v87 = vunpack.c.l.b16 %v65
    %v88 = vunpack.c.h.b16 %v65
    %v89 = vunpack.c.l.b16 %v66
    %v90 = vunpack.c.h.b16 %v66
    %v91 = vpack.c.b16 %v77, %v75
    %v92 = vpack.c.b16 %v78, %v76
    %v93 = vpack.c.b16 %v81, %v79
    %v94 = vpack.c.b16 %v82, %v80
    %v95 = vpack.c.b16 %v85, %v83
    %v96 = vpack.c.b16 %v86, %v84
    %v97 = vpack.c.b16 %v89, %v87
    %v98 = vpack.c.b16 %v90, %v88
    %vm107 = vcmask 523264
    %v109 = vsel %vm107, %v50, 0
    %111 = vmatpush.bf16.msra.mxu0 0
    %112 = vmatpush.bf16.msra.mxu0 0
    %113 = vmatpush.bf16.msra.mxu0 0
    %114 = vmatpush.bf16.msra.mxu0 0
    %115 = vmatpush.bf16.msra.mxu0 %v97
    %116 = vmatpush.bf16.msra.mxu0 %v95
    %117 = vmatpush.bf16.msra.mxu0 %v93
    %118 = vmatpush.bf16.msra.mxu0 %v91
    %119 = vmatmul.bf16.gmra.mxu0 %v109
    %v120 = vpop.f32.mrf.mxu0
    %v121 = vadd.f32 0.0, %v120
    %v122 = vpop.f32.mrf.mxu0
    %123 = vdwg.mxu0
    %124 = vmatpush.bf16.msra.mxu0 0
    %125 = vmatpush.bf16.msra.mxu0 0
    %126 = vmatpush.bf16.msra.mxu0 0
    %127 = vmatpush.bf16.msra.mxu0 0
    %128 = vmatpush.bf16.msra.mxu0 %v98
    %129 = vmatpush.bf16.msra.mxu0 %v96
    %130 = vmatpush.bf16.msra.mxu0 %v94
    %131 = vmatpush.bf16.msra.mxu0 %v92
    %132 = vmatmul.bf16.gmra.mxu0 %v109
    %v133 = vpop.f32.mrf.mxu0
    %v134 = vadd.f32 0.0, %v133
    %v135 = vpop.f32.mrf.mxu0
    %136 = vdwg.mxu0
    %v145 = vunpack.c.l.b16 %v51
    %v146 = vunpack.c.h.b16 %v51
    %v147 = vunpack.c.l.b16 %v52
    %v148 = vunpack.c.h.b16 %v52
    %v149 = vunpack.c.l.b16 %v53
    %v150 = vunpack.c.h.b16 %v53
    %v151 = vunpack.c.l.b16 %v54
    %v152 = vunpack.c.h.b16 %v54
    %v153 = vunpack.c.l.b16 %v55
    %v154 = vunpack.c.h.b16 %v55
    %v155 = vunpack.c.l.b16 %v56
    %v156 = vunpack.c.h.b16 %v56
    %v157 = vunpack.c.l.b16 %v57
    %v158 = vunpack.c.h.b16 %v57
    %v159 = vunpack.c.l.b16 %v58
    %v160 = vunpack.c.h.b16 %v58
    %v161 = vpack.c.b16 %v147, %v145
    %v162 = vpack.c.b16 %v148, %v146
    %v163 = vpack.c.b16 %v151, %v149
    %v164 = vpack.c.b16 %v152, %v150
    %v165 = vpack.c.b16 %v155, %v153
    %v166 = vpack.c.b16 %v156, %v154
    %v167 = vpack.c.b16 %v159, %v157
    %v168 = vpack.c.b16 %v160, %v158
    %v178 = vsel %vm107, %v48, 0
    %180 = vmatpush.bf16.msra.mxu0 0
    %181 = vmatpush.bf16.msra.mxu0 0
    %182 = vmatpush.bf16.msra.mxu0 0
    %183 = vmatpush.bf16.msra.mxu0 0
    %184 = vmatpush.bf16.msra.mxu0 %v167
    %185 = vmatpush.bf16.msra.mxu0 %v165
    %186 = vmatpush.bf16.msra.mxu0 %v163
    %187 = vmatpush.bf16.msra.mxu0 %v161
    %188 = vmatmul.bf16.gmra.mxu0 %v178
    %v189 = vpop.f32.mrf.mxu0
    %v190 = vadd.f32 %v121, %v189
    %v191 = vpop.f32.mrf.mxu0
    %192 = vdwg.mxu0
    %193 = vmatpush.bf16.msra.mxu0 0
    %194 = vmatpush.bf16.msra.mxu0 0
    %195 = vmatpush.bf16.msra.mxu0 0
    %196 = vmatpush.bf16.msra.mxu0 0
    %197 = vmatpush.bf16.msra.mxu0 %v168
    %198 = vmatpush.bf16.msra.mxu0 %v166
    %199 = vmatpush.bf16.msra.mxu0 %v164
    %200 = vmatpush.bf16.msra.mxu0 %v162
    %201 = vmatmul.bf16.gmra.mxu0 %v178
    %v202 = vpop.f32.mrf.mxu0
    %v203 = vadd.f32 %v134, %v202
    %v204 = vpop.f32.mrf.mxu0
    %205 = vdwg.mxu0
    %v206 = vld [vmem:[%s3] sm:$0x3]
    %v208 = vperm.slane %v206, 0
    %v209 = vperm.slane %v206, 1
    %v212 = vadd.f32 %v190, %v208
    %v213 = vadd.f32 %v203, %v209
    %vm214 = vcmp.gt.f32.partialorder %v212, 0.0
    %vm215 = vcmp.gt.f32.partialorder %v213, 0.0
    %v216 = vmul.f32 %v212, 0.01
    %v217 = vmul.f32 %v213, 0.01
    %v218 = vsel %vm214, %v212, %v216
    %v219 = vsel %vm215, %v213, %v217
    %v220 = vpack.c.bf16 %v218, %v218
    %v221 = vpack.c.bf16 %v219, %v219
    %v222 = vld [vmem:[#allocation2] sm:$0xff]
    %v223 = vld [vmem:[#allocation2 + $0x8] sm:$0xff]
    %v224 = vld [vmem:[#allocation2 + $0x10] sm:$0xff]
    %v225 = vld [vmem:[#allocation2 + $0x18] sm:$0xff]
    %v226 = vld [vmem:[#allocation2 + $0x20] sm:$0xff]
    %v227 = vld [vmem:[#allocation2 + $0x28] sm:$0xff]
    %v228 = vld [vmem:[#allocation2 + $0x30] sm:$0xff]
    %v229 = vld [vmem:[#allocation2 + $0x38] sm:$0xff]
    %v230 = vld [vmem:[#allocation2 + $0x40] sm:$0xff]
    %v231 = vld [vmem:[#allocation2 + $0x48] sm:$0xff]
    %v232 = vld [vmem:[#allocation2 + $0x50] sm:$0xff]
    %v233 = vld [vmem:[#allocation2 + $0x58] sm:$0xff]
    %v234 = vld [vmem:[#allocation2 + $0x60] sm:$0xff]
    %v235 = vld [vmem:[#allocation2 + $0x68] sm:$0xff]
    %v236 = vld [vmem:[#allocation2 + $0x70] sm:$0xff]
    %v237 = vld [vmem:[#allocation2 + $0x78] sm:$0xff]
    %v238 = vld [vmem:[#allocation2 + $0x80] sm:$0xff]
    %v239 = vld [vmem:[#allocation2 + $0x88] sm:$0xff]
    %v240 = vld [vmem:[#allocation2 + $0x90] sm:$0xff]
    %v241 = vld [vmem:[#allocation2 + $0x98] sm:$0xff]
    %v242 = vld [vmem:[#allocation2 + $0xa0] sm:$0xff]
    %v243 = vld [vmem:[#allocation2 + $0xa8] sm:$0xff]
    %v244 = vld [vmem:[#allocation2 + $0xb0] sm:$0xff]
    %v245 = vld [vmem:[#allocation2 + $0xb8] sm:$0xff]
    %v246 = vld [vmem:[#allocation2 + $0xc0] sm:$0xff]
    %v247 = vld [vmem:[#allocation2 + $0xc8] sm:$0xff]
    %v248 = vld [vmem:[#allocation2 + $0xd0] sm:$0xff]
    %v249 = vld [vmem:[#allocation2 + $0xd8] sm:$0xff]
    %v250 = vld [vmem:[#allocation2 + $0xe0] sm:$0xff]
    %v251 = vld [vmem:[#allocation2 + $0xe8] sm:$0xff]
    %v252 = vld [vmem:[#allocation2 + $0xf0] sm:$0xff]
    %v253 = vld [vmem:[#allocation2 + $0xf8] sm:$0xff]
    %v254 = vld [vmem:[#allocation2 + $0x100] sm:$0xff]
    %v255 = vld [vmem:[#allocation2 + $0x108] sm:$0xff]
    %v256 = vld [vmem:[#allocation2 + $0x110] sm:$0xff]
    %v257 = vld [vmem:[#allocation2 + $0x118] sm:$0xff]
    %v258 = vld [vmem:[#allocation2 + $0x120] sm:$0xff]
    %v259 = vld [vmem:[#allocation2 + $0x128] sm:$0xff]
    %v260 = vld [vmem:[#allocation2 + $0x130] sm:$0xff]
    %v261 = vld [vmem:[#allocation2 + $0x138] sm:$0xff]
    %v262 = vld [vmem:[#allocation2 + $0x140] sm:$0xff]
    %v263 = vld [vmem:[#allocation2 + $0x148] sm:$0xff]
    %v264 = vld [vmem:[#allocation2 + $0x150] sm:$0xff]
    %v265 = vld [vmem:[#allocation2 + $0x158] sm:$0xff]
    %v266 = vld [vmem:[#allocation2 + $0x160] sm:$0xff]
    %v267 = vld [vmem:[#allocation2 + $0x168] sm:$0xff]
    %v268 = vld [vmem:[#allocation2 + $0x170] sm:$0xff]
    %v269 = vld [vmem:[#allocation2 + $0x178] sm:$0xff]
    %v270 = vld [vmem:[#allocation2 + $0x180] sm:$0xff]
    %v271 = vld [vmem:[#allocation2 + $0x188] sm:$0xff]
    %v272 = vld [vmem:[#allocation2 + $0x190] sm:$0xff]
    %v273 = vld [vmem:[#allocation2 + $0x198] sm:$0xff]
    %v274 = vld [vmem:[#allocation2 + $0x1a0] sm:$0xff]
    %v275 = vld [vmem:[#allocation2 + $0x1a8] sm:$0xff]
    %v276 = vld [vmem:[#allocation2 + $0x1b0] sm:$0xff]
    %v277 = vld [vmem:[#allocation2 + $0x1b8] sm:$0xff]
    %v278 = vld [vmem:[#allocation2 + $0x1c0] sm:$0xff]
    %v279 = vld [vmem:[#allocation2 + $0x1c8] sm:$0xff]
    %v280 = vld [vmem:[#allocation2 + $0x1d0] sm:$0xff]
    %v281 = vld [vmem:[#allocation2 + $0x1d8] sm:$0xff]
    %v282 = vld [vmem:[#allocation2 + $0x1e0] sm:$0xff]
    %v283 = vld [vmem:[#allocation2 + $0x1e8] sm:$0xff]
    %v284 = vld [vmem:[#allocation2 + $0x1f0] sm:$0xff]
    %v285 = vld [vmem:[#allocation2 + $0x1f8] sm:$0xff]
    %v286 = vld [vmem:[%s5] sm:$0xf]
    %v288 = vperm.slane %v286, 0
    %v289 = vperm.slane %v286, 1
    %v290 = vperm.slane %v286, 2
    %v291 = vperm.slane %v286, 3
    %v360 = vunpack.c.l.b16 %v222
    %v361 = vunpack.c.h.b16 %v222
    %v362 = vunpack.c.l.b16 %v223
    %v363 = vunpack.c.h.b16 %v223
    %v364 = vunpack.c.l.b16 %v224
    %v365 = vunpack.c.h.b16 %v224
    %v366 = vunpack.c.l.b16 %v225
    %v367 = vunpack.c.h.b16 %v225
    %v368 = vunpack.c.l.b16 %v226
    %v369 = vunpack.c.h.b16 %v226
    %v370 = vunpack.c.l.b16 %v227
    %v371 = vunpack.c.h.b16 %v227
    %v372 = vunpack.c.l.b16 %v228
    %v373 = vunpack.c.h.b16 %v228
    %v374 = vunpack.c.l.b16 %v229
    %v375 = vunpack.c.h.b16 %v229
    %v376 = vunpack.c.l.b16 %v230
    %v377 = vunpack.c.h.b16 %v230
    %v378 = vunpack.c.l.b16 %v231
    %v379 = vunpack.c.h.b16 %v231
    %v380 = vunpack.c.l.b16 %v232
    %v381 = vunpack.c.h.b16 %v232
    %v382 = vunpack.c.l.b16 %v233
    %v383 = vunpack.c.h.b16 %v233
    %v384 = vunpack.c.l.b16 %v234
    %v385 = vunpack.c.h.b16 %v234
    %v386 = vunpack.c.l.b16 %v235
    %v387 = vunpack.c.h.b16 %v235
    %v388 = vunpack.c.l.b16 %v236
    %v389 = vunpack.c.h.b16 %v236
    %v390 = vunpack.c.l.b16 %v237
    %v391 = vunpack.c.h.b16 %v237
    %v392 = vunpack.c.l.b16 %v238
    %v393 = vunpack.c.h.b16 %v238
    %v394 = vunpack.c.l.b16 %v239
    %v395 = vunpack.c.h.b16 %v239
    %v396 = vunpack.c.l.b16 %v240
    %v397 = vunpack.c.h.b16 %v240
    %v398 = vunpack.c.l.b16 %v241
    %v399 = vunpack.c.h.b16 %v241
    %v400 = vunpack.c.l.b16 %v242
    %v401 = vunpack.c.h.b16 %v242
    %v402 = vunpack.c.l.b16 %v243
    %v403 = vunpack.c.h.b16 %v243
    %v404 = vunpack.c.l.b16 %v244
    %v405 = vunpack.c.h.b16 %v244
    %v406 = vunpack.c.l.b16 %v245
    %v407 = vunpack.c.h.b16 %v245
    %v408 = vunpack.c.l.b16 %v246
    %v409 = vunpack.c.h.b16 %v246
    %v410 = vunpack.c.l.b16 %v247
    %v411 = vunpack.c.h.b16 %v247
    %v412 = vunpack.c.l.b16 %v248
    %v413 = vunpack.c.h.b16 %v248
    %v414 = vunpack.c.l.b16 %v249
    %v415 = vunpack.c.h.b16 %v249
    %v416 = vunpack.c.l.b16 %v250
    %v417 = vunpack.c.h.b16 %v250
    %v418 = vunpack.c.l.b16 %v251
    %v419 = vunpack.c.h.b16 %v251
    %v420 = vunpack.c.l.b16 %v252
    %v421 = vunpack.c.h.b16 %v252
    %v422 = vunpack.c.l.b16 %v253
    %v423 = vunpack.c.h.b16 %v253
    %v424 = vunpack.c.l.b16 %v254
    %v425 = vunpack.c.h.b16 %v254
    %v426 = vunpack.c.l.b16 %v255
    %v427 = vunpack.c.h.b16 %v255
    %v428 = vunpack.c.l.b16 %v256
    %v429 = vunpack.c.h.b16 %v256
    %v430 = vunpack.c.l.b16 %v257
    %v431 = vunpack.c.h.b16 %v257
    %v432 = vunpack.c.l.b16 %v258
    %v433 = vunpack.c.h.b16 %v258
    %v434 = vunpack.c.l.b16 %v259
    %v435 = vunpack.c.h.b16 %v259
    %v436 = vunpack.c.l.b16 %v260
    %v437 = vunpack.c.h.b16 %v260
    %v438 = vunpack.c.l.b16 %v261
    %v439 = vunpack.c.h.b16 %v261
    %v440 = vunpack.c.l.b16 %v262
    %v441 = vunpack.c.h.b16 %v262
    %v442 = vunpack.c.l.b16 %v263
    %v443 = vunpack.c.h.b16 %v263
    %v444 = vunpack.c.l.b16 %v264
    %v445 = vunpack.c.h.b16 %v264
    %v446 = vunpack.c.l.b16 %v265
    %v447 = vunpack.c.h.b16 %v265
    %v448 = vunpack.c.l.b16 %v266
    %v449 = vunpack.c.h.b16 %v266
    %v450 = vunpack.c.l.b16 %v267
    %v451 = vunpack.c.h.b16 %v267
    %v452 = vunpack.c.l.b16 %v268
    %v453 = vunpack.c.h.b16 %v268
    %v454 = vunpack.c.l.b16 %v269
    %v455 = vunpack.c.h.b16 %v269
    %v456 = vunpack.c.l.b16 %v270
    %v457 = vunpack.c.h.b16 %v270
    %v458 = vunpack.c.l.b16 %v271
    %v459 = vunpack.c.h.b16 %v271
    %v460 = vunpack.c.l.b16 %v272
    %v461 = vunpack.c.h.b16 %v272
    %v462 = vunpack.c.l.b16 %v273
    %v463 = vunpack.c.h.b16 %v273
    %v464 = vunpack.c.l.b16 %v274
    %v465 = vunpack.c.h.b16 %v274
    %v466 = vunpack.c.l.b16 %v275
    %v467 = vunpack.c.h.b16 %v275
    %v468 = vunpack.c.l.b16 %v276
    %v469 = vunpack.c.h.b16 %v276
    %v470 = vunpack.c.l.b16 %v277
    %v471 = vunpack.c.h.b16 %v277
    %v472 = vunpack.c.l.b16 %v278
    %v473 = vunpack.c.h.b16 %v278
    %v474 = vunpack.c.l.b16 %v279
    %v475 = vunpack.c.h.b16 %v279
    %v476 = vunpack.c.l.b16 %v280
    %v477 = vunpack.c.h.b16 %v280
    %v478 = vunpack.c.l.b16 %v281
    %v479 = vunpack.c.h.b16 %v281
    %v480 = vunpack.c.l.b16 %v282
    %v481 = vunpack.c.h.b16 %v282
    %v482 = vunpack.c.l.b16 %v283
    %v483 = vunpack.c.h.b16 %v283
    %v484 = vunpack.c.l.b16 %v284
    %v485 = vunpack.c.h.b16 %v284
    %v486 = vunpack.c.l.b16 %v285
    %v487 = vunpack.c.h.b16 %v285
    %v488 = vpack.c.b16 %v364, %v360
    %v489 = vpack.c.b16 %v365, %v361
    %v490 = vpack.c.b16 %v366, %v362
    %v491 = vpack.c.b16 %v367, %v363
    %v492 = vpack.c.b16 %v372, %v368
    %v493 = vpack.c.b16 %v373, %v369
    %v494 = vpack.c.b16 %v374, %v370
    %v495 = vpack.c.b16 %v375, %v371
    %v496 = vpack.c.b16 %v380, %v376
    %v497 = vpack.c.b16 %v381, %v377
    %v498 = vpack.c.b16 %v382, %v378
    %v499 = vpack.c.b16 %v383, %v379
    %v500 = vpack.c.b16 %v388, %v384
    %v501 = vpack.c.b16 %v389, %v385
    %v502 = vpack.c.b16 %v390, %v386
    %v503 = vpack.c.b16 %v391, %v387
    %v504 = vpack.c.b16 %v396, %v392
    %v505 = vpack.c.b16 %v397, %v393
    %v506 = vpack.c.b16 %v398, %v394
    %v507 = vpack.c.b16 %v399, %v395
    %v508 = vpack.c.b16 %v404, %v400
    %v509 = vpack.c.b16 %v405, %v401
    %v510 = vpack.c.b16 %v406, %v402
    %v511 = vpack.c.b16 %v407, %v403
    %v512 = vpack.c.b16 %v412, %v408
    %v513 = vpack.c.b16 %v413, %v409
    %v514 = vpack.c.b16 %v414, %v410
    %v515 = vpack.c.b16 %v415, %v411
    %v516 = vpack.c.b16 %v420, %v416
    %v517 = vpack.c.b16 %v421, %v417
    %v518 = vpack.c.b16 %v422, %v418
    %v519 = vpack.c.b16 %v423, %v419
    %v520 = vpack.c.b16 %v428, %v424
    %v521 = vpack.c.b16 %v429, %v425
    %v522 = vpack.c.b16 %v430, %v426
    %v523 = vpack.c.b16 %v431, %v427
    %v524 = vpack.c.b16 %v436, %v432
    %v525 = vpack.c.b16 %v437, %v433
    %v526 = vpack.c.b16 %v438, %v434
    %v527 = vpack.c.b16 %v439, %v435
    %v528 = vpack.c.b16 %v444, %v440
    %v529 = vpack.c.b16 %v445, %v441
    %v530 = vpack.c.b16 %v446, %v442
    %v531 = vpack.c.b16 %v447, %v443
    %v532 = vpack.c.b16 %v452, %v448
    %v533 = vpack.c.b16 %v453, %v449
    %v534 = vpack.c.b16 %v454, %v450
    %v535 = vpack.c.b16 %v455, %v451
    %v536 = vpack.c.b16 %v460, %v456
    %v537 = vpack.c.b16 %v461, %v457
    %v538 = vpack.c.b16 %v462, %v458
    %v539 = vpack.c.b16 %v463, %v459
    %v540 = vpack.c.b16 %v468, %v464
    %v541 = vpack.c.b16 %v469, %v465
    %v542 = vpack.c.b16 %v470, %v466
    %v543 = vpack.c.b16 %v471, %v467
    %v544 = vpack.c.b16 %v476, %v472
    %v545 = vpack.c.b16 %v477, %v473
    %v546 = vpack.c.b16 %v478, %v474
    %v547 = vpack.c.b16 %v479, %v475
    %v548 = vpack.c.b16 %v484, %v480
    %v549 = vpack.c.b16 %v485, %v481
    %v550 = vpack.c.b16 %v486, %v482
    %v551 = vpack.c.b16 %v487, %v483
    %616 = vmatpush.bf16.msra.mxu0 %v516
    %617 = vmatpush.bf16.msra.mxu0 %v512
    %618 = vmatpush.bf16.msra.mxu0 %v508
    %619 = vmatpush.bf16.msra.mxu0 %v504
    %620 = vmatpush.bf16.msra.mxu0 %v500
    %621 = vmatpush.bf16.msra.mxu0 %v496
    %622 = vmatpush.bf16.msra.mxu0 %v492
    %623 = vmatpush.bf16.msra.mxu0 %v488
    %624 = vmatmul.bf16.gmra.mxu0 %v220
    %v625 = vpop.f32.mrf.mxu0
    %v626 = vadd.f32 %v288, %v625
    %v627 = vpop.f32.mrf.mxu0
    %628 = vdwg.mxu0
    %629 = vmatpush.bf16.msra.mxu0 %v548
    %630 = vmatpush.bf16.msra.mxu0 %v544
    %631 = vmatpush.bf16.msra.mxu0 %v540
    %632 = vmatpush.bf16.msra.mxu0 %v536
    %633 = vmatpush.bf16.msra.mxu0 %v532
    %634 = vmatpush.bf16.msra.mxu0 %v528
    %635 = vmatpush.bf16.msra.mxu0 %v524
    %636 = vmatpush.bf16.msra.mxu0 %v520
    %637 = vmatmul.bf16.gmra.mxu0 %v221
    %v638 = vpop.f32.mrf.mxu0
    %v639 = vadd.f32 %v626, %v638
    %v640 = vpop.f32.mrf.mxu0
    %641 = vdwg.mxu0
    %642 = vmatpush.bf16.msra.mxu0 %v517
    %643 = vmatpush.bf16.msra.mxu0 %v513
    %644 = vmatpush.bf16.msra.mxu0 %v509
    %645 = vmatpush.bf16.msra.mxu0 %v505
    %646 = vmatpush.bf16.msra.mxu0 %v501
    %647 = vmatpush.bf16.msra.mxu0 %v497
    %648 = vmatpush.bf16.msra.mxu0 %v493
    %649 = vmatpush.bf16.msra.mxu0 %v489
    %650 = vmatmul.bf16.gmra.mxu0 %v220
    %v651 = vpop.f32.mrf.mxu0
    %v652 = vadd.f32 %v289, %v651
    %v653 = vpop.f32.mrf.mxu0
    %654 = vdwg.mxu0
    %655 = vmatpush.bf16.msra.mxu0 %v549
    %656 = vmatpush.bf16.msra.mxu0 %v545
    %657 = vmatpush.bf16.msra.mxu0 %v541
    %658 = vmatpush.bf16.msra.mxu0 %v537
    %659 = vmatpush.bf16.msra.mxu0 %v533
    %660 = vmatpush.bf16.msra.mxu0 %v529
    %661 = vmatpush.bf16.msra.mxu0 %v525
    %662 = vmatpush.bf16.msra.mxu0 %v521
    %663 = vmatmul.bf16.gmra.mxu0 %v221
    %v664 = vpop.f32.mrf.mxu0
    %v665 = vadd.f32 %v652, %v664
    %v666 = vpop.f32.mrf.mxu0
    %667 = vdwg.mxu0
    %668 = vmatpush.bf16.msra.mxu0 %v518
    %669 = vmatpush.bf16.msra.mxu0 %v514
    %670 = vmatpush.bf16.msra.mxu0 %v510
    %671 = vmatpush.bf16.msra.mxu0 %v506
    %672 = vmatpush.bf16.msra.mxu0 %v502
    %673 = vmatpush.bf16.msra.mxu0 %v498
    %674 = vmatpush.bf16.msra.mxu0 %v494
    %675 = vmatpush.bf16.msra.mxu0 %v490
    %676 = vmatmul.bf16.gmra.mxu0 %v220
    %v677 = vpop.f32.mrf.mxu0
    %v678 = vadd.f32 %v290, %v677
    %v679 = vpop.f32.mrf.mxu0
    %680 = vdwg.mxu0
    %681 = vmatpush.bf16.msra.mxu0 %v550
    %682 = vmatpush.bf16.msra.mxu0 %v546
    %683 = vmatpush.bf16.msra.mxu0 %v542
    %684 = vmatpush.bf16.msra.mxu0 %v538
    %685 = vmatpush.bf16.msra.mxu0 %v534
    %686 = vmatpush.bf16.msra.mxu0 %v530
    %687 = vmatpush.bf16.msra.mxu0 %v526
    %688 = vmatpush.bf16.msra.mxu0 %v522
    %689 = vmatmul.bf16.gmra.mxu0 %v221
    %v690 = vpop.f32.mrf.mxu0
    %v691 = vadd.f32 %v678, %v690
    %v692 = vpop.f32.mrf.mxu0
    %693 = vdwg.mxu0
    %694 = vmatpush.bf16.msra.mxu0 %v519
    %695 = vmatpush.bf16.msra.mxu0 %v515
    %696 = vmatpush.bf16.msra.mxu0 %v511
    %697 = vmatpush.bf16.msra.mxu0 %v507
    %698 = vmatpush.bf16.msra.mxu0 %v503
    %699 = vmatpush.bf16.msra.mxu0 %v499
    %700 = vmatpush.bf16.msra.mxu0 %v495
    %701 = vmatpush.bf16.msra.mxu0 %v491
    %702 = vmatmul.bf16.gmra.mxu0 %v220
    %v703 = vpop.f32.mrf.mxu0
    %v704 = vadd.f32 %v291, %v703
    %v705 = vpop.f32.mrf.mxu0
    %706 = vdwg.mxu0
    %707 = vmatpush.bf16.msra.mxu0 %v551
    %708 = vmatpush.bf16.msra.mxu0 %v547
    %709 = vmatpush.bf16.msra.mxu0 %v543
    %710 = vmatpush.bf16.msra.mxu0 %v539
    %711 = vmatpush.bf16.msra.mxu0 %v535
    %712 = vmatpush.bf16.msra.mxu0 %v531
    %713 = vmatpush.bf16.msra.mxu0 %v527
    %714 = vmatpush.bf16.msra.mxu0 %v523
    %715 = vmatmul.bf16.gmra.mxu0 %v221
    %v716 = vpop.f32.mrf.mxu0
    %v717 = vadd.f32 %v704, %v716
    %v718 = vpop.f32.mrf.mxu0
    %719 = vdwg.mxu0
    %vm720 = vcmp.gt.f32.partialorder %v639, 0.0
    %vm721 = vcmp.gt.f32.partialorder %v665, 0.0
    %vm722 = vcmp.gt.f32.partialorder %v691, 0.0
    %vm723 = vcmp.gt.f32.partialorder %v717, 0.0
    %v724 = vmul.f32 %v639, 0.01
    %v725 = vmul.f32 %v665, 0.01
    %v726 = vmul.f32 %v691, 0.01
    %v727 = vmul.f32 %v717, 0.01
    %v728 = vsel %vm720, %v639, %v724
    %v729 = vsel %vm721, %v665, %v725
    %v730 = vsel %vm722, %v691, %v726
    %v731 = vsel %vm723, %v717, %v727
    %v732 = vpack.c.bf16 %v728, %v728
    %v733 = vpack.c.bf16 %v729, %v729
    %v734 = vpack.c.bf16 %v730, %v730
    %v735 = vpack.c.bf16 %v731, %v731
    %v736 = vld [vmem:[%s6] sm:$0xf]
    %v737 = vld [vmem:[%s6 + $0x4] sm:$0xf]
    %v738 = vld [vmem:[%s6 + $0x8] sm:$0xf]
    %v739 = vld [vmem:[%s6 + $0xc] sm:$0xf]
    %v740 = vld [vmem:[%s6 + $0x10] sm:$0xf]
    %v741 = vld [vmem:[%s6 + $0x14] sm:$0xf]
    %v742 = vld [vmem:[%s6 + $0x18] sm:$0xf]
    %v743 = vld [vmem:[%s6 + $0x1c] sm:$0xf]
    %v744 = vld [vmem:[%s6 + $0x20] sm:$0xf]
    %v745 = vld [vmem:[%s6 + $0x24] sm:$0xf]
    %v746 = vld [vmem:[%s6 + $0x28] sm:$0xf]
    %v747 = vld [vmem:[%s6 + $0x2c] sm:$0xf]
    %v748 = vld [vmem:[%s6 + $0x30] sm:$0xf]
    %v749 = vld [vmem:[%s6 + $0x34] sm:$0xf]
    %v750 = vld [vmem:[%s6 + $0x38] sm:$0xf]
    %v751 = vld [vmem:[%s6 + $0x3c] sm:$0xf]
    %v752 = vld [vmem:[%s6 + $0x40] sm:$0xf]
    %v753 = vld [vmem:[%s6 + $0x44] sm:$0xf]
    %v754 = vld [vmem:[%s6 + $0x48] sm:$0xf]
    %v755 = vld [vmem:[%s6 + $0x4c] sm:$0xf]
    %v756 = vld [vmem:[%s6 + $0x50] sm:$0xf]
    %v757 = vld [vmem:[%s6 + $0x54] sm:$0xf]
    %v758 = vld [vmem:[%s6 + $0x58] sm:$0xf]
    %v759 = vld [vmem:[%s6 + $0x5c] sm:$0xf]
    %v760 = vld [vmem:[%s6 + $0x60] sm:$0xf]
    %v761 = vld [vmem:[%s6 + $0x64] sm:$0xf]
    %v762 = vld [vmem:[%s6 + $0x68] sm:$0xf]
    %v763 = vld [vmem:[%s6 + $0x6c] sm:$0xf]
    %v764 = vld [vmem:[%s6 + $0x70] sm:$0xf]
    %v765 = vld [vmem:[%s6 + $0x74] sm:$0xf]
    %v766 = vld [vmem:[%s6 + $0x78] sm:$0xf]
    %v767 = vld [vmem:[%s6 + $0x7c] sm:$0xf]
    %v768 = vld [vmem:[%s6 + $0x80] sm:$0xf]
    %v769 = vld [vmem:[%s6 + $0x84] sm:$0xf]
    %v770 = vld [vmem:[%s6 + $0x88] sm:$0xf]
    %v771 = vld [vmem:[%s6 + $0x8c] sm:$0xf]
    %v772 = vld [vmem:[%s6 + $0x90] sm:$0xf]
    %v773 = vld [vmem:[%s6 + $0x94] sm:$0xf]
    %v774 = vld [vmem:[%s6 + $0x98] sm:$0xf]
    %v775 = vld [vmem:[%s6 + $0x9c] sm:$0xf]
    %v776 = vld [vmem:[%s6 + $0xa0] sm:$0xf]
    %v777 = vld [vmem:[%s6 + $0xa4] sm:$0xf]
    %v778 = vld [vmem:[%s6 + $0xa8] sm:$0xf]
    %v779 = vld [vmem:[%s6 + $0xac] sm:$0xf]
    %v780 = vld [vmem:[%s6 + $0xb0] sm:$0xf]
    %v781 = vld [vmem:[%s6 + $0xb4] sm:$0xf]
    %v782 = vld [vmem:[%s6 + $0xb8] sm:$0xf]
    %v783 = vld [vmem:[%s6 + $0xbc] sm:$0xf]
    %v784 = vld [vmem:[%s6 + $0xc0] sm:$0xf]
    %v785 = vld [vmem:[%s6 + $0xc4] sm:$0xf]
    %v786 = vld [vmem:[%s6 + $0xc8] sm:$0xf]
    %v787 = vld [vmem:[%s6 + $0xcc] sm:$0xf]
    %v788 = vld [vmem:[%s6 + $0xd0] sm:$0xf]
    %v789 = vld [vmem:[%s6 + $0xd4] sm:$0xf]
    %v790 = vld [vmem:[%s6 + $0xd8] sm:$0xf]
    %v791 = vld [vmem:[%s6 + $0xdc] sm:$0xf]
    %v792 = vld [vmem:[%s6 + $0xe0] sm:$0xf]
    %v793 = vld [vmem:[%s6 + $0xe4] sm:$0xf]
    %v794 = vld [vmem:[%s6 + $0xe8] sm:$0xf]
    %v795 = vld [vmem:[%s6 + $0xec] sm:$0xf]
    %v796 = vld [vmem:[%s6 + $0xf0] sm:$0xf]
    %v797 = vld [vmem:[%s6 + $0xf4] sm:$0xf]
    %v798 = vld [vmem:[%s6 + $0xf8] sm:$0xf]
    %v799 = vld [vmem:[%s6 + $0xfc] sm:$0xf]
    %v800 = vld [vmem:[%s7] sm:$0x1]
    %v802 = vperm.slane %v800, 0
    %v868 = vunpack.c.l.b16 %v736
    %v869 = vunpack.c.l.b16 %v737
    %v870 = vunpack.c.l.b16 %v738
    %v871 = vunpack.c.l.b16 %v739
    %v872 = vunpack.c.l.b16 %v740
    %v873 = vunpack.c.l.b16 %v741
    %v874 = vunpack.c.l.b16 %v742
    %v875 = vunpack.c.l.b16 %v743
    %v876 = vunpack.c.l.b16 %v744
    %v877 = vunpack.c.l.b16 %v745
    %v878 = vunpack.c.l.b16 %v746
    %v879 = vunpack.c.l.b16 %v747
    %v880 = vunpack.c.l.b16 %v748
    %v881 = vunpack.c.l.b16 %v749
    %v882 = vunpack.c.l.b16 %v750
    %v883 = vunpack.c.l.b16 %v751
    %v884 = vunpack.c.l.b16 %v752
    %v885 = vunpack.c.l.b16 %v753
    %v886 = vunpack.c.l.b16 %v754
    %v887 = vunpack.c.l.b16 %v755
    %v888 = vunpack.c.l.b16 %v756
    %v889 = vunpack.c.l.b16 %v757
    %v890 = vunpack.c.l.b16 %v758
    %v891 = vunpack.c.l.b16 %v759
    %v892 = vunpack.c.l.b16 %v760
    %v893 = vunpack.c.l.b16 %v761
    %v894 = vunpack.c.l.b16 %v762
    %v895 = vunpack.c.l.b16 %v763
    %v896 = vunpack.c.l.b16 %v764
    %v897 = vunpack.c.l.b16 %v765
    %v898 = vunpack.c.l.b16 %v766
    %v899 = vunpack.c.l.b16 %v767
    %v900 = vunpack.c.l.b16 %v768
    %v901 = vunpack.c.l.b16 %v769
    %v902 = vunpack.c.l.b16 %v770
    %v903 = vunpack.c.l.b16 %v771
    %v904 = vunpack.c.l.b16 %v772
    %v905 = vunpack.c.l.b16 %v773
    %v906 = vunpack.c.l.b16 %v774
    %v907 = vunpack.c.l.b16 %v775
    %v908 = vunpack.c.l.b16 %v776
    %v909 = vunpack.c.l.b16 %v777
    %v910 = vunpack.c.l.b16 %v778
    %v911 = vunpack.c.l.b16 %v779
    %v912 = vunpack.c.l.b16 %v780
    %v913 = vunpack.c.l.b16 %v781
    %v914 = vunpack.c.l.b16 %v782
    %v915 = vunpack.c.l.b16 %v783
    %v916 = vunpack.c.l.b16 %v784
    %v917 = vunpack.c.l.b16 %v785
    %v918 = vunpack.c.l.b16 %v786
    %v919 = vunpack.c.l.b16 %v787
    %v920 = vunpack.c.l.b16 %v788
    %v921 = vunpack.c.l.b16 %v789
    %v922 = vunpack.c.l.b16 %v790
    %v923 = vunpack.c.l.b16 %v791
    %v924 = vunpack.c.l.b16 %v792
    %v925 = vunpack.c.l.b16 %v793
    %v926 = vunpack.c.l.b16 %v794
    %v927 = vunpack.c.l.b16 %v795
    %v928 = vunpack.c.l.b16 %v796
    %v929 = vunpack.c.l.b16 %v797
    %v930 = vunpack.c.l.b16 %v798
    %v931 = vunpack.c.l.b16 %v799
    %v932 = vpack.c.b16 %v869, %v868
    %v933 = vpack.c.b16 %v871, %v870
    %v934 = vpack.c.b16 %v873, %v872
    %v935 = vpack.c.b16 %v875, %v874
    %v936 = vpack.c.b16 %v877, %v876
    %v937 = vpack.c.b16 %v879, %v878
    %v938 = vpack.c.b16 %v881, %v880
    %v939 = vpack.c.b16 %v883, %v882
    %v940 = vpack.c.b16 %v885, %v884
    %v941 = vpack.c.b16 %v887, %v886
    %v942 = vpack.c.b16 %v889, %v888
    %v943 = vpack.c.b16 %v891, %v890
    %v944 = vpack.c.b16 %v893, %v892
    %v945 = vpack.c.b16 %v895, %v894
    %v946 = vpack.c.b16 %v897, %v896
    %v947 = vpack.c.b16 %v899, %v898
    %v948 = vpack.c.b16 %v901, %v900
    %v949 = vpack.c.b16 %v903, %v902
    %v950 = vpack.c.b16 %v905, %v904
    %v951 = vpack.c.b16 %v907, %v906
    %v952 = vpack.c.b16 %v909, %v908
    %v953 = vpack.c.b16 %v911, %v910
    %v954 = vpack.c.b16 %v913, %v912
    %v955 = vpack.c.b16 %v915, %v914
    %v956 = vpack.c.b16 %v917, %v916
    %v957 = vpack.c.b16 %v919, %v918
    %v958 = vpack.c.b16 %v921, %v920
    %v959 = vpack.c.b16 %v923, %v922
    %v960 = vpack.c.b16 %v925, %v924
    %v961 = vpack.c.b16 %v927, %v926
    %v962 = vpack.c.b16 %v929, %v928
    %v963 = vpack.c.b16 %v931, %v930
    %996 = vmatpush.bf16.msra.mxu0 %v939
    %997 = vmatpush.bf16.msra.mxu0 %v938
    %998 = vmatpush.bf16.msra.mxu0 %v937
    %999 = vmatpush.bf16.msra.mxu0 %v936
    %1000 = vmatpush.bf16.msra.mxu0 %v935
    %1001 = vmatpush.bf16.msra.mxu0 %v934
    %1002 = vmatpush.bf16.msra.mxu0 %v933
    %1003 = vmatpush.bf16.msra.mxu0 %v932
    %1004 = vmatmul.bf16.gmra.mxu0 %v732
    %v1005 = vpop.f32.mrf.mxu0
    %v1006 = vadd.f32 %v802, %v1005
    %v1007 = vpop.f32.mrf.mxu0
    %1008 = vdwg.mxu0
    %1009 = vmatpush.bf16.msra.mxu0 %v947
    %1010 = vmatpush.bf16.msra.mxu0 %v946
    %1011 = vmatpush.bf16.msra.mxu0 %v945
    %1012 = vmatpush.bf16.msra.mxu0 %v944
    %1013 = vmatpush.bf16.msra.mxu0 %v943
    %1014 = vmatpush.bf16.msra.mxu0 %v942
    %1015 = vmatpush.bf16.msra.mxu0 %v941
    %1016 = vmatpush.bf16.msra.mxu0 %v940
    %1017 = vmatmul.bf16.gmra.mxu0 %v733
    %v1018 = vpop.f32.mrf.mxu0
    %v1019 = vadd.f32 %v1006, %v1018
    %v1020 = vpop.f32.mrf.mxu0
    %1021 = vdwg.mxu0
    %1022 = vmatpush.bf16.msra.mxu0 %v955
    %1023 = vmatpush.bf16.msra.mxu0 %v954
    %1024 = vmatpush.bf16.msra.mxu0 %v953
    %1025 = vmatpush.bf16.msra.mxu0 %v952
    %1026 = vmatpush.bf16.msra.mxu0 %v951
    %1027 = vmatpush.bf16.msra.mxu0 %v950
    %1028 = vmatpush.bf16.msra.mxu0 %v949
    %1029 = vmatpush.bf16.msra.mxu0 %v948
    %1030 = vmatmul.bf16.gmra.mxu0 %v734
    %v1031 = vpop.f32.mrf.mxu0
    %v1032 = vadd.f32 %v1019, %v1031
    %v1033 = vpop.f32.mrf.mxu0
    %1034 = vdwg.mxu0
    %1035 = vmatpush.bf16.msra.mxu0 %v963
    %1036 = vmatpush.bf16.msra.mxu0 %v962
    %1037 = vmatpush.bf16.msra.mxu0 %v961
    %1038 = vmatpush.bf16.msra.mxu0 %v960
    %1039 = vmatpush.bf16.msra.mxu0 %v959
    %1040 = vmatpush.bf16.msra.mxu0 %v958
    %1041 = vmatpush.bf16.msra.mxu0 %v957
    %1042 = vmatpush.bf16.msra.mxu0 %v956
    %1043 = vmatmul.bf16.gmra.mxu0 %v735
    %v1044 = vpop.f32.mrf.mxu0
    %v1045 = vadd.f32 %v1032, %v1044
    %v1046 = vpop.f32.mrf.mxu0
    %1047 = vdwg.mxu0
    %1048 = vst.msk [vmem:[#allocation5] sm:$0xff] %vm107, %v1045
    // Predicated region
    $region38: #{tpu_custom_call.1} parent=1 // pred_check
      _
    $region39: #{tpu_custom_call.1} parent=1 // pred_check_branch
      %1050 = sbr.rel (0) target = $region41
    $region40: #{tpu_custom_call.1} parent=1 // pred_region
      %1052 = vsyncadd [#allocation4], 0
      %s1054 = sshll.u32 [#allocation5], 4
      %s1055 = int_to_ptr.vmem [resolvable:$true] %s1054
      %s1056 = sshll.u32 %s8, 4
      %s1057 = int_to_ptr.hbm [resolvable:$true] %s1056
      %1059 = dma.vmem_to_hbm [thread:$0]  %s1055, 128, %s1057, [#allocation4]
    $region41: #{tpu_custom_call.1} parent=1 // pred_fallthru
      _
    // Predicated region
    $region42: #{tpu_custom_call.1} parent=1 // pred_check
      _
    $region43: #{tpu_custom_call.1} parent=1 // pred_check_branch
      %1061 = sbr.rel (0) target = $region45
    $region44: #{tpu_custom_call.1} parent=1 // pred_region
      %1063 = dma.done [#allocation4], 128
    $region45: #{tpu_custom_call.1} parent=1 // pred_fallthru
      _
    %1064 = vsyncpa [#allocation3], 1
    %1065 = vsyncpa [#allocation4], 1

</llo_original>
